<compile_context>
chip_gen: v7x
topology: tpu7x:2x2x1
jax: 0.10.0
libtpu: 0.0.40
codegen_flags: <defaults>
</compile_context>

<pallas_src>
import jax
import jax.numpy as jnp
from jax.experimental import pallas as pl
from jax.experimental.pallas import tpu as pltpu

STATE_DIM = 6      # "(batch_size, 6) camera's state"
HIDDEN = 32
N_ACTIONS = 3      # torch.argmax(action) - 1
GAMMA = 0.98       # satellite_discount

# ---- packed parameter slab layout (rows x 64 lanes, f32) --------------------
PACK_COLS = 2 * HIDDEN          # 64: [actor | critic] hidden side by side
ROW_W1 = 0                      # rows 0:6   -> [actor W1 | critic W1]   (6, 64)
ROW_B1 = STATE_DIM              # row  6     -> [actor b1 | critic b1]   (1, 64)
ROW_W2 = 8                      # rows 8:72  -> block-diag second layer  (64, 64)
ROW_B2 = ROW_W2 + 2 * HIDDEN    # row  72    -> [actor b2 | critic b2 | 0] (1, 64)
PACK_ROWS = 80                  # padded to a multiple of 8 sublanes


# ---------------------------------------------------------------------------
# Host-side parameter packing (do once per parameter update, not per step)
# ---------------------------------------------------------------------------
def pack_params(actor_params, critic_params):
    aw1, ab1, aw2, ab2 = actor_params      # (6,32) (1,32) (32,3) (1,3)
    cw1, cb1, cw2, cb2 = critic_params     # (6,32) (1,32) (32,1) (1,1)
    f32 = jnp.float32

    w1 = jnp.concatenate([aw1, cw1], axis=1)                                  # (6, 64)
    b1 = jnp.concatenate([ab1, cb1], axis=1)                                  # (1, 64)
    # block-diagonal second layer: cols 0:3 = actor head, col 3 = critic head
    top = jnp.concatenate([aw2, jnp.zeros((HIDDEN, 1), f32)], axis=1)         # (32, 4)
    bot = jnp.concatenate([jnp.zeros((HIDDEN, N_ACTIONS), f32), cw2], axis=1) # (32, 4)
    w2 = jnp.concatenate([top, bot], axis=0)                                  # (64, 4)
    b2 = jnp.concatenate([ab2, cb2], axis=1)                                  # (1, 4)

    w2p = jnp.pad(w2, ((0, 0), (0, PACK_COLS - w2.shape[1])))                 # (64, 64)
    b2p = jnp.pad(b2, ((0, 0), (0, PACK_COLS - b2.shape[1])))                 # (1, 64)

    slab = jnp.concatenate(
        [w1,                                        # rows 0:6
         b1,                                        # row 6
         jnp.zeros((1, PACK_COLS), f32),            # row 7 (align W2 to sublane 8)
         w2p,                                       # rows 8:72
         b2p,                                       # row 72
         jnp.zeros((PACK_ROWS - 73, PACK_COLS), f32)],  # pad to 80 rows
        axis=0)
    return slab                                                               # (80, 64)


# ---------------------------------------------------------------------------
# Fused Pallas kernel: actor + critic(state) + argmax + transition +
#                      critic(next_state) + MSE, single launch, no scratch.
# ---------------------------------------------------------------------------
def critic_td_fused_kernel(s_ref, p_ref, loss_ref):
    state = s_ref[...]                                        # (B, STATE_DIM)

    w1 = p_ref[ROW_W1:ROW_W1 + STATE_DIM, :]                  # (6, 64)
    b1 = p_ref[ROW_B1:ROW_B1 + 1, :]                          # (1, 64)
    w2 = p_ref[ROW_W2:ROW_W2 + 2 * HIDDEN, :]                 # (64, 64) block-diag
    b2 = p_ref[ROW_B2:ROW_B2 + 1, :]                          # (1, 64)

    def fused_pass(x):
        # One MXU chain computes BOTH networks (block-diagonal packing).
        h = jnp.maximum(jnp.dot(x, w1, preferred_element_type=jnp.float32) + b1, 0.0)
        return jnp.dot(h, w2, preferred_element_type=jnp.float32) + b2   # (B, 64)

    # --- pass 1: actor(state) and critic(state) together -------------------
    o1 = fused_pass(state)
    logits = o1[:, 0:N_ACTIONS]                               # actor(state)  (B, 3)
    value = o1[:, N_ACTIONS:N_ACTIONS + 1]                    # critic(state) (B, 1)

    # --- action = torch.argmax(logits) - 1 (global flat argmax, first-max tie)
    max_v = jnp.max(logits)
    rows = jax.lax.broadcasted_iota(jnp.int32, logits.shape, 0)
    cols = jax.lax.broadcasted_iota(jnp.int32, logits.shape, 1)
    flat_idx = rows * logits.shape[1] + cols
    big = jnp.int32(logits.size)
    idx = jnp.min(jnp.where(logits == max_v, flat_idx, big))
    a = (idx - 1).astype(jnp.float32)

    # --- synthetic transition (deterministic env.transition_batch stand-in) -
    next_state = state + 0.1 * a
    reward = -0.01 * jnp.sum(state * state, axis=-1, keepdims=True) + 0.05 * a

    # --- pass 2: critic(next_state) (true dependency on the action) --------
    o2 = fused_pass(next_state)
    next_value = o2[:, N_ACTIONS:N_ACTIONS + 1]               # (B, 1)

    # --- TD target + MSE (mean reduction, matching nn.MSELoss) -------------
    td_target = reward + GAMMA * next_value
    diff = value - td_target
    loss_ref[0, 0] = jnp.sum(diff * diff) / float(diff.size)


# ---------------------------------------------------------------------------
# Wrapper: mirrors CriticTD.forward(state, indexes) -> scalar TD loss
# ---------------------------------------------------------------------------
def critic_td_forward(state, actor_params, critic_params):
    params_slab = pack_params(actor_params, critic_params)   # cheap XLA glue; 2 DMAs in
    loss = pl.pallas_call(
        critic_td_fused_kernel,
        out_shape=jax.ShapeDtypeStruct((1, 1), jnp.float32),
        in_specs=[pl.BlockSpec(memory_space=pltpu.MemorySpace.VMEM),
                  pl.BlockSpec(memory_space=pltpu.MemorySpace.VMEM)],
        out_specs=pl.BlockSpec(memory_space=pltpu.MemorySpace.SMEM),
    )(state, params_slab)
    return loss[0, 0]


# ---------------------------------------------------------------------------
# Pure-JAX reference (un-fused, original op order) for validation
# ---------------------------------------------------------------------------
def _mlp_ref(x, params):
    w1, b1, w2, b2 = params
    h = jnp.maximum(
        jnp.dot(x, w1, precision=jax.lax.Precision.HIGHEST) + b1, 0.0)
    return jnp.dot(h, w2, precision=jax.lax.Precision.HIGHEST) + b2


def critic_td_reference(state, actor_params, critic_params):
    logits = _mlp_ref(state, actor_params)
    a = (jnp.argmax(logits.reshape(-1)) - 1).astype(jnp.float32)
    next_state = state + 0.1 * a
    reward = -0.01 * jnp.sum(state * state, axis=-1, keepdims=True) + 0.05 * a
    td_target = reward + GAMMA * _mlp_ref(next_state, critic_params)
    value = _mlp_ref(state, critic_params)
    diff = value - td_target
    return jnp.mean(diff * diff)


# ---------------------------------------------------------------------------
# Deterministic parameter init (synthetic; no checkpoint load)
# ---------------------------------------------------------------------------
def init_mlp_params(key, in_dim, hidden, out_dim):
    k1, k2 = jax.random.split(key)
    w1 = jax.random.normal(k1, (in_dim, hidden), jnp.float32) / jnp.sqrt(in_dim)
    b1 = jnp.zeros((1, hidden), jnp.float32)
    w2 = jax.random.normal(k2, (hidden, out_dim), jnp.float32) / jnp.sqrt(hidden)
    b2 = jnp.zeros((1, out_dim), jnp.float32)
    return (w1, b1, w2, b2)


if __name__ == "__main__":
    key = jax.random.PRNGKey(0)
    k_state, k_actor, k_critic = jax.random.split(key, 3)

    B = 8  # multiple of 8 (sublane-aligned)
    state = jax.random.normal(k_state, (B, STATE_DIM), jnp.float32)

    actor_params = init_mlp_params(k_actor, STATE_DIM, HIDDEN, N_ACTIONS)
    critic_params = init_mlp_params(k_critic, STATE_DIM, HIDDEN, 1)

    loss = jax.jit(critic_td_forward)(state, actor_params, critic_params)
    jax.block_until_ready(loss)

    ref = critic_td_reference(state, actor_params, critic_params)
    assert loss.shape == () and jnp.isfinite(loss)
    assert jnp.allclose(loss, ref, rtol=1e-2, atol=1e-3), (loss, ref)
    print("KERNEL_OK")
</pallas_src>

<mosaic_0001>
module attributes {stable_mosaic.version = 11 : i64} {
  func.func @critic_td_fused_kernel(%arg0: memref<8x6xf32, #tpu.memory_space<vmem>>, %arg1: memref<80x64xf32, #tpu.memory_space<vmem>>, %arg2: memref<1x1xf32, #tpu.memory_space<smem>>) attributes {dimension_semantics = [], scalar_prefetch = 0 : i64, scratch_operands = 0 : i64, tpu.core_type = #tpu.core_type<tc>} {
    %c0 = arith.constant 0 : index
    %c0_0 = arith.constant 0 : index
    %0 = vector.load %arg0[%c0, %c0_0] : memref<8x6xf32, #tpu.memory_space<vmem>>, vector<8x6xf32>
    %c0_1 = arith.constant 0 : index
    %c0_2 = arith.constant 0 : index
    %1 = vector.load %arg1[%c0_1, %c0_2] : memref<80x64xf32, #tpu.memory_space<vmem>>, vector<6x64xf32>
    %c6 = arith.constant 6 : index
    %c0_3 = arith.constant 0 : index
    %2 = vector.load %arg1[%c6, %c0_3] : memref<80x64xf32, #tpu.memory_space<vmem>>, vector<1x64xf32>
    %c8 = arith.constant 8 : index
    %c0_4 = arith.constant 0 : index
    %3 = vector.load %arg1[%c8, %c0_4] : memref<80x64xf32, #tpu.memory_space<vmem>>, vector<64x64xf32>
    %c72 = arith.constant 72 : index
    %c0_5 = arith.constant 0 : index
    %4 = vector.load %arg1[%c72, %c0_5] : memref<80x64xf32, #tpu.memory_space<vmem>>, vector<1x64xf32>
    %cst = arith.constant dense<0.000000e+00> : vector<8x64xf32>
    %5 = tpu.matmul %0, %1, %cst {dimension_numbers = #tpu.dot_dimension_numbers<[1], [0], [0], [1], [0, 0, 1, 1], [], []>} : vector<8x6xf32>, vector<6x64xf32>, vector<8x64xf32> -> vector<8x64xf32>
    %6 = vector.broadcast %2 : vector<1x64xf32> to vector<8x64xf32>
    %7 = arith.addf %5, %6 : vector<8x64xf32>
    %cst_6 = arith.constant 0.000000e+00 : f32
    %8 = vector.broadcast %cst_6 : f32 to vector<8x64xf32>
    %9 = arith.maximumf %7, %8 : vector<8x64xf32>
    %cst_7 = arith.constant dense<0.000000e+00> : vector<8x64xf32>
    %10 = tpu.matmul %9, %3, %cst_7 {dimension_numbers = #tpu.dot_dimension_numbers<[1], [0], [0], [1], [0, 0, 1, 1], [], []>} : vector<8x64xf32>, vector<64x64xf32>, vector<8x64xf32> -> vector<8x64xf32>
    %11 = vector.broadcast %4 : vector<1x64xf32> to vector<8x64xf32>
    %12 = arith.addf %10, %11 : vector<8x64xf32>
    %13 = vector.extract_strided_slice %12 {offsets = [0, 0], sizes = [8, 3], strides = [1, 1]} : vector<8x64xf32> to vector<8x3xf32>
    %14 = vector.extract_strided_slice %12 {offsets = [0, 3], sizes = [8, 1], strides = [1, 1]} : vector<8x64xf32> to vector<8x1xf32>
    %15 = vector.shape_cast %13 : vector<8x3xf32> to vector<1x8x3xf32>
    %cst_8 = arith.constant dense<0xFF800000> : vector<1xf32>
    %16 = vector.multi_reduction <maximumf>, %15, %cst_8 [1, 2] : vector<1x8x3xf32> to vector<1xf32>
    %17 = vector.shape_cast %16 : vector<1xf32> to vector<1x1x1xf32>
    %18 = vector.extract %17[0, 0, 0] : f32 from vector<1x1x1xf32>
    %19 = tpu.iota {dimensions = array<i32: 0>} : vector<8x3xi32>
    %20 = tpu.iota {dimensions = array<i32: 1>} : vector<8x3xi32>
    %c3_i32 = arith.constant 3 : i32
    %21 = vector.broadcast %c3_i32 : i32 to vector<8x3xi32>
    %22 = arith.muli %19, %21 : vector<8x3xi32>
    %23 = arith.addi %22, %20 : vector<8x3xi32>
    %24 = vector.broadcast %18 : f32 to vector<8x3xf32>
    %25 = arith.cmpf oeq, %13, %24 : vector<8x3xf32>
    %c24_i32 = arith.constant 24 : i32
    %26 = vector.broadcast %c24_i32 : i32 to vector<8x3xi32>
    %27 = arith.select %25, %23, %26 : vector<8x3xi1>, vector<8x3xi32>
    %28 = vector.shape_cast %27 : vector<8x3xi32> to vector<1x8x3xi32>
    %cst_9 = arith.constant dense<2147483647> : vector<1xi32>
    %29 = vector.multi_reduction <minsi>, %28, %cst_9 [1, 2] : vector<1x8x3xi32> to vector<1xi32>
    %30 = vector.shape_cast %29 : vector<1xi32> to vector<1x1x1xi32>
    %31 = vector.extract %30[0, 0, 0] : i32 from vector<1x1x1xi32>
    %c1_i32 = arith.constant 1 : i32
    %32 = arith.subi %31, %c1_i32 : i32
    %33 = arith.sitofp %32 : i32 to f32
    %cst_10 = arith.constant 1.000000e-01 : f32
    %34 = arith.mulf %cst_10, %33 : f32
    %35 = vector.broadcast %34 : f32 to vector<8x6xf32>
    %36 = arith.addf %0, %35 : vector<8x6xf32>
    %37 = arith.mulf %0, %0 : vector<8x6xf32>
    %cst_11 = arith.constant dense<0.000000e+00> : vector<8xf32>
    %38 = vector.multi_reduction <add>, %37, %cst_11 [1] : vector<8x6xf32> to vector<8xf32>
    %39 = vector.shape_cast %38 : vector<8xf32> to vector<8x1xf32>
    %cst_12 = arith.constant -0.00999999977 : f32
    %40 = vector.broadcast %cst_12 : f32 to vector<8x1xf32>
    %41 = arith.mulf %40, %39 : vector<8x1xf32>
    %cst_13 = arith.constant 5.000000e-02 : f32
    %42 = arith.mulf %cst_13, %33 : f32
    %43 = vector.broadcast %42 : f32 to vector<8x1xf32>
    %44 = arith.addf %41, %43 : vector<8x1xf32>
    %cst_14 = arith.constant dense<0.000000e+00> : vector<8x64xf32>
    %45 = tpu.matmul %36, %1, %cst_14 {dimension_numbers = #tpu.dot_dimension_numbers<[1], [0], [0], [1], [0, 0, 1, 1], [], []>} : vector<8x6xf32>, vector<6x64xf32>, vector<8x64xf32> -> vector<8x64xf32>
    %46 = vector.broadcast %2 : vector<1x64xf32> to vector<8x64xf32>
    %47 = arith.addf %45, %46 : vector<8x64xf32>
    %cst_15 = arith.constant 0.000000e+00 : f32
    %48 = vector.broadcast %cst_15 : f32 to vector<8x64xf32>
    %49 = arith.maximumf %47, %48 : vector<8x64xf32>
    %cst_16 = arith.constant dense<0.000000e+00> : vector<8x64xf32>
    %50 = tpu.matmul %49, %3, %cst_16 {dimension_numbers = #tpu.dot_dimension_numbers<[1], [0], [0], [1], [0, 0, 1, 1], [], []>} : vector<8x64xf32>, vector<64x64xf32>, vector<8x64xf32> -> vector<8x64xf32>
    %51 = vector.broadcast %4 : vector<1x64xf32> to vector<8x64xf32>
    %52 = arith.addf %50, %51 : vector<8x64xf32>
    %53 = vector.extract_strided_slice %52 {offsets = [0, 3], sizes = [8, 1], strides = [1, 1]} : vector<8x64xf32> to vector<8x1xf32>
    %cst_17 = arith.constant 9.800000e-01 : f32
    %54 = vector.broadcast %cst_17 : f32 to vector<8x1xf32>
    %55 = arith.mulf %54, %53 : vector<8x1xf32>
    %56 = arith.addf %44, %55 : vector<8x1xf32>
    %57 = arith.subf %14, %56 : vector<8x1xf32>
    %58 = arith.mulf %57, %57 : vector<8x1xf32>
    %59 = vector.shape_cast %58 : vector<8x1xf32> to vector<1x8x1xf32>
    %cst_18 = arith.constant dense<0.000000e+00> : vector<1xf32>
    %60 = vector.multi_reduction <add>, %59, %cst_18 [1, 2] : vector<1x8x1xf32> to vector<1xf32>
    %61 = vector.shape_cast %60 : vector<1xf32> to vector<1x1x1xf32>
    %62 = vector.extract %61[0, 0, 0] : f32 from vector<1x1x1xf32>
    %cst_19 = arith.constant 8.000000e+00 : f32
    %63 = arith.divf %62, %cst_19 : f32
    %c0_20 = arith.constant 0 : index
    %c0_21 = arith.constant 0 : index
    %64 = memref.load %arg2[%c0_20, %c0_21] : memref<1x1xf32, #tpu.memory_space<smem>>
    memref.store %63, %arg2[%c0_20, %c0_21] : memref<1x1xf32, #tpu.memory_space<smem>>
    return
  }
}

</mosaic_0001>

<llo_original>
// kernel: critic_td_forward.1
$region0: #{critic_td_forward.1}
  #allocation0 [shape = 'u32[]', space=smem, size = 0x4, offset = 0x4, fixed_abs, tag = 'smem constant byte address 0x4 - core index']
  #allocation1 [shape = 'u32[144,128]{1,0:T(1,128)}', space=vmem, size = 0x12000, scoped, tag = 'internal scratch']
  %s0 = inlined_call_operand.vmem [shape: f32[8,6], index: 0, kind: input, shape index: {}]
  %s1 = inlined_call_operand.vmem [shape: f32[80,64], index: 1, kind: input, shape index: {}]
  %s2 = inlined_call_operand.hbm [shape: f32[1,1], index: 2, kind: output, shape index: {}]
  %s3 = sld [smem:[#allocation0]]
  $region18: #{critic_td_forward.1} parent=0
    _
  %s5 = ssub.s32 1, %s3
  %s6 = scalar_select 0, %s5, %s3
  $region1: #{critic_td_forward.1} parent=0
    #allocation2 [shape = 'u8[512]{0}', space=smem, size = 0x200, scoped, tag = 'output window, operand 0, single buffered']
    #allocation3 [shape = 's32[1]{0}', space=sflag, size = 0x4, scoped, tag = 'scoped memory for critic_td_forward.1']
    %7 = vsyncpa [#allocation3], 0
    // Predicated region
    $region2: #{critic_td_forward.1} parent=1 // pred_check
      _
    $region3: #{critic_td_forward.1} parent=1 // pred_check_branch
      %9 = sbr.rel (0) target = $region5
    $region4: #{critic_td_forward.1} parent=1 // pred_region
      _
    $region5: #{critic_td_forward.1} parent=1 // pred_fallthru
      _
    // Predicated region
    $region6: #{critic_td_forward.1} parent=1 // pred_check
      _
    $region7: #{critic_td_forward.1} parent=1 // pred_check_branch
      %11 = sbr.rel (0) target = $region9
    $region8: #{critic_td_forward.1} parent=1 // pred_region
      _
    $region9: #{critic_td_forward.1} parent=1 // pred_fallthru
      _
    %v12 = vld [vmem:[%s0] sm:$0xff]
    %v13 = vld [vmem:[%s1] sm:$0x3f]
    %v14 = vld [vmem:[%s1 + $0x6] sm:$0x1]
    %v15 = vld [vmem:[%s1 + $0x8] sm:$0xff]
    %v16 = vld [vmem:[%s1 + $0x10] sm:$0xff]
    %v17 = vld [vmem:[%s1 + $0x18] sm:$0xff]
    %v18 = vld [vmem:[%s1 + $0x20] sm:$0xff]
    %v19 = vld [vmem:[%s1 + $0x28] sm:$0xff]
    %v20 = vld [vmem:[%s1 + $0x30] sm:$0xff]
    %v21 = vld [vmem:[%s1 + $0x38] sm:$0xff]
    %v22 = vld [vmem:[%s1 + $0x40] sm:$0xff]
    %v23 = vld [vmem:[%s1 + $0x48] sm:$0x1]
    %v24 = vlaneseq
    %v25 = vshrl.u32 %v24, 7
    %v26 = vsub.s32 0, %v25
    %v27 = vrot.slane %v14, %v26
    %vm28 = vcmask 48128
    %v30 = vsel %vm28, %v12, 0
    %vm32 = vcmask 1045504
    %v34 = vsel %vm32, %v13, 0
    %36 = vmatprep.subr.mxu0 0.0
    %37 = vmatpush1.msra.mxu0 %v34
    %38 = vmatprep.subr.mxu0 0.0
    %39 = vmatpush1.msra.mxu0 0.0
    %40 = vmatprep.subr.mxu0 0.0
    %41 = vmatpush1.msra.mxu0 0.0
    %42 = vmatprep.subr.mxu0 0.0
    %43 = vmatpush1.msra.mxu0 0.0
    %44 = vmatprep.subr.mxu0 0.0
    %45 = vmatpush1.msra.mxu0 0.0
    %46 = vmatprep.subr.mxu0 0.0
    %47 = vmatpush1.msra.mxu0 0.0
    %48 = vmatprep.subr.mxu0 0.0
    %49 = vmatpush1.msra.mxu0 0.0
    %50 = vmatprep.subr.mxu0 0.0
    %51 = vmatpush1.msra.mxu0 0.0
    %52 = vmatprep.subr.mxu0 0.0
    %53 = vmatpush1.msra.mxu0 0.0
    %54 = vmatprep.subr.mxu0 0.0
    %55 = vmatpush1.msra.mxu0 0.0
    %56 = vmatprep.subr.mxu0 0.0
    %57 = vmatpush1.msra.mxu0 0.0
    %58 = vmatprep.subr.mxu0 0.0
    %59 = vmatpush1.msra.mxu0 0.0
    %60 = vmatprep.subr.mxu0 0.0
    %61 = vmatpush1.msra.mxu0 0.0
    %62 = vmatprep.subr.mxu0 0.0
    %63 = vmatpush1.msra.mxu0 0.0
    %64 = vmatprep.subr.mxu0 0.0
    %65 = vmatpush1.msra.mxu0 0.0
    %66 = vmatprep.subr.mxu0 0.0
    %67 = vmatpush1.msra.mxu0 0.0
    %68 = vmatprep.subr.mxu0 0.0
    %69 = vmatpush1.msra.mxu0 0.0
    %70 = vmatprep.subr.mxu0 0.0
    %71 = vmatpush1.msra.mxu0 0.0
    %72 = vmatprep.subr.mxu0 0.0
    %73 = vmatpush1.msra.mxu0 0.0
    %74 = vmatprep.subr.mxu0 0.0
    %75 = vmatpush1.msra.mxu0 0.0
    %76 = vmatprep.subr.mxu0 0.0
    %77 = vmatpush1.msra.mxu0 0.0
    %78 = vmatprep.subr.mxu0 0.0
    %79 = vmatpush1.msra.mxu0 0.0
    %80 = vmatprep.subr.mxu0 0.0
    %81 = vmatpush1.msra.mxu0 0.0
    %82 = vmatprep.subr.mxu0 0.0
    %83 = vmatpush1.msra.mxu0 0.0
    %84 = vmatprep.subr.mxu0 0.0
    %85 = vmatpush1.msra.mxu0 0.0
    %86 = vmatprep.subr.mxu0 0.0
    %87 = vmatpush1.msra.mxu0 0.0
    %88 = vmatprep.subr.mxu0 0.0
    %89 = vmatpush1.msra.mxu0 0.0
    %90 = vmatprep.subr.mxu0 0.0
    %91 = vmatpush1.msra.mxu0 0.0
    %92 = vmatprep.subr.mxu0 0.0
    %93 = vmatpush1.msra.mxu0 0.0
    %94 = vmatprep.subr.mxu0 0.0
    %95 = vmatpush1.msra.mxu0 0.0
    %96 = vmatprep.subr.mxu0 0.0
    %97 = vmatpush1.msra.mxu0 0.0
    %98 = vmatprep.subr.mxu0 0.0
    %99 = vmatpush1.msra.mxu0 0.0
    %100 = vmatprep.mubr.f32.mxu0 0.0
    %101 = vmatmul.mubr.f32.gmra.mrb[0].mxu0 %v30
    %v102 = vpop.f32.mrb[0].mxu0
    %v103 = vadd.f32 %v27, %v102
    %v104 = vpop.f32.mrb[0].mxu0
    %105 = vdwg.mxu0
    %v106 = vmax.f32 %v103, 0.0
    %v107 = vlaneseq
    %v108 = vshrl.u32 %v107, 7
    %v109 = vsub.s32 0, %v108
    %v110 = vrot.slane %v23, %v109
    %vm111 = vcmask 523264
    %v113 = vsel %vm111, %v106, 0
    %115 = vmatprep.subr.mxu0 0.0
    %116 = vmatpush1.msra.mxu0 %v15
    %117 = vmatprep.subr.mxu0 0.0
    %118 = vmatpush1.msra.mxu0 %v16
    %119 = vmatprep.subr.mxu0 0.0
    %120 = vmatpush1.msra.mxu0 %v17
    %121 = vmatprep.subr.mxu0 0.0
    %122 = vmatpush1.msra.mxu0 %v18
    %123 = vmatprep.subr.mxu0 0.0
    %124 = vmatpush1.msra.mxu0 %v19
    %125 = vmatprep.subr.mxu0 0.0
    %126 = vmatpush1.msra.mxu0 %v20
    %127 = vmatprep.subr.mxu0 0.0
    %128 = vmatpush1.msra.mxu0 %v21
    %129 = vmatprep.subr.mxu0 0.0
    %130 = vmatpush1.msra.mxu0 %v22
    %131 = vmatprep.subr.mxu0 0.0
    %132 = vmatpush1.msra.mxu0 0.0
    %133 = vmatprep.subr.mxu0 0.0
    %134 = vmatpush1.msra.mxu0 0.0
    %135 = vmatprep.subr.mxu0 0.0
    %136 = vmatpush1.msra.mxu0 0.0
    %137 = vmatprep.subr.mxu0 0.0
    %138 = vmatpush1.msra.mxu0 0.0
    %139 = vmatprep.subr.mxu0 0.0
    %140 = vmatpush1.msra.mxu0 0.0
    %141 = vmatprep.subr.mxu0 0.0
    %142 = vmatpush1.msra.mxu0 0.0
    %143 = vmatprep.subr.mxu0 0.0
    %144 = vmatpush1.msra.mxu0 0.0
    %145 = vmatprep.subr.mxu0 0.0
    %146 = vmatpush1.msra.mxu0 0.0
    %147 = vmatprep.subr.mxu0 0.0
    %148 = vmatpush1.msra.mxu0 0.0
    %149 = vmatprep.subr.mxu0 0.0
    %150 = vmatpush1.msra.mxu0 0.0
    %151 = vmatprep.subr.mxu0 0.0
    %152 = vmatpush1.msra.mxu0 0.0
    %153 = vmatprep.subr.mxu0 0.0
    %154 = vmatpush1.msra.mxu0 0.0
    %155 = vmatprep.subr.mxu0 0.0
    %156 = vmatpush1.msra.mxu0 0.0
    %157 = vmatprep.subr.mxu0 0.0
    %158 = vmatpush1.msra.mxu0 0.0
    %159 = vmatprep.subr.mxu0 0.0
    %160 = vmatpush1.msra.mxu0 0.0
    %161 = vmatprep.subr.mxu0 0.0
    %162 = vmatpush1.msra.mxu0 0.0
    %163 = vmatprep.subr.mxu0 0.0
    %164 = vmatpush1.msra.mxu0 0.0
    %165 = vmatprep.subr.mxu0 0.0
    %166 = vmatpush1.msra.mxu0 0.0
    %167 = vmatprep.subr.mxu0 0.0
    %168 = vmatpush1.msra.mxu0 0.0
    %169 = vmatprep.subr.mxu0 0.0
    %170 = vmatpush1.msra.mxu0 0.0
    %171 = vmatprep.subr.mxu0 0.0
    %172 = vmatpush1.msra.mxu0 0.0
    %173 = vmatprep.subr.mxu0 0.0
    %174 = vmatpush1.msra.mxu0 0.0
    %175 = vmatprep.subr.mxu0 0.0
    %176 = vmatpush1.msra.mxu0 0.0
    %177 = vmatprep.subr.mxu0 0.0
    %178 = vmatpush1.msra.mxu0 0.0
    %179 = vmatprep.mubr.f32.mxu0 0.0
    %180 = vmatmul.mubr.f32.gmra.mrb[0].mxu0 %v113
    %v181 = vpop.f32.mrb[0].mxu0
    %v182 = vadd.f32 %v110, %v181
    %v183 = vpop.f32.mrb[0].mxu0
    %184 = vdwg.mxu0
    %vm185 = vcmask 23552
    %v186 = vsel %vm185, %v182, -inf
    %187 = vmax.xlane.f32.xlu0 %v186
    %v188 = vpop.xlane.xlu0 %187
    %v189 = vrot.slane %v188, 4
    %v190 = vmax.f32 %v188, %v189
    %v191 = vrot.slane %v190, 2
    %v192 = vmax.f32 %v190, %v191
    %v193 = vrot.slane %v192, 1
    %v194 = vmax.f32 %v192, %v193
    %s195 = vtos %v194
    %v196 = vlaneseq
    %v197 = vshrl.u32 %v196, 7
    %v198 = vlaneseq
    %v199 = vand.u32 %v198, 127
    %v200 = vmul.u32 %v197, 3
    %v201 = vadd.s32 %v200, %v199
    %v202 = vstv %s195
    %vm203 = vcmp.eq.f32.partialorder %v182, %v202
    %v204 = vsel %vm203, %v201, 24
    %v205 = vsel %vm185, %v204, 2147483647
    %v206 = vand.u32 %v205, 65535
    %v207 = vshra.s32 %v205, 16
    %v208 = vcvt.s32.f32 %v206
    %v209 = vcvt.s32.f32 %v207
    %210 = vmin.xlane.f32.xlu0 %v209
    %v211 = vpop.xlane.xlu0 %210
    %vm212 = vcmp.eq.f32.partialorder %v209, %v211
    %v213 = vsel %vm212, %v208, inf
    %214 = vmin.xlane.f32.xlu0 %v213
    %v215 = vpop.xlane.xlu0 %214
    %v216 = vcvt.f32.s32 %v215
    %v217 = vcvt.f32.s32 %v211
    %v218 = vshll.u32 %v217, 16
    %v219 = vadd.s32 %v218, %v216
    %v220 = vrot.slane %v219, 4
    %vm221 = vcmp.lt.s32.totalorder %v219, %v220
    %v222 = vsel %vm221, %v219, %v220
    %v223 = vrot.slane %v222, 2
    %vm224 = vcmp.lt.s32.totalorder %v222, %v223
    %v225 = vsel %vm224, %v222, %v223
    %v226 = vrot.slane %v225, 1
    %vm227 = vcmp.lt.s32.totalorder %v225, %v226
    %v228 = vsel %vm227, %v225, %v226
    %s229 = vtos %v228
    %s230 = ssub.s32 %s229, 1
    %s231 = scvt.s32.f32 %s230
    %s232 = smul.f32 %s231, 0.1
    %v233 = vstv %s232
    %v234 = vadd.f32 %v12, %v233
    %v235 = vmul.f32 %v12, %v12
    %v236 = vsel %vm28, %v235, 0.0
    %237 = vadd.xlane.f32.xlu0 %v236
    %v238 = vpop.xlane.xlu0 %237
    %v239 = vmul.f32 %v238, -0.01
    %s240 = smul.f32 %s231, 0.05
    %v241 = vstv %s240
    %v242 = vadd.f32 %v239, %v241
    %v244 = vsel %vm28, %v234, 0
    %246 = vmatprep.subr.mxu0 0.0
    %247 = vmatpush1.msra.mxu0 %v34
    %248 = vmatprep.subr.mxu0 0.0
    %249 = vmatpush1.msra.mxu0 0.0
    %250 = vmatprep.subr.mxu0 0.0
    %251 = vmatpush1.msra.mxu0 0.0
    %252 = vmatprep.subr.mxu0 0.0
    %253 = vmatpush1.msra.mxu0 0.0
    %254 = vmatprep.subr.mxu0 0.0
    %255 = vmatpush1.msra.mxu0 0.0
    %256 = vmatprep.subr.mxu0 0.0
    %257 = vmatpush1.msra.mxu0 0.0
    %258 = vmatprep.subr.mxu0 0.0
    %259 = vmatpush1.msra.mxu0 0.0
    %260 = vmatprep.subr.mxu0 0.0
    %261 = vmatpush1.msra.mxu0 0.0
    %262 = vmatprep.subr.mxu0 0.0
    %263 = vmatpush1.msra.mxu0 0.0
    %264 = vmatprep.subr.mxu0 0.0
    %265 = vmatpush1.msra.mxu0 0.0
    %266 = vmatprep.subr.mxu0 0.0
    %267 = vmatpush1.msra.mxu0 0.0
    %268 = vmatprep.subr.mxu0 0.0
    %269 = vmatpush1.msra.mxu0 0.0
    %270 = vmatprep.subr.mxu0 0.0
    %271 = vmatpush1.msra.mxu0 0.0
    %272 = vmatprep.subr.mxu0 0.0
    %273 = vmatpush1.msra.mxu0 0.0
    %274 = vmatprep.subr.mxu0 0.0
    %275 = vmatpush1.msra.mxu0 0.0
    %276 = vmatprep.subr.mxu0 0.0
    %277 = vmatpush1.msra.mxu0 0.0
    %278 = vmatprep.subr.mxu0 0.0
    %279 = vmatpush1.msra.mxu0 0.0
    %280 = vmatprep.subr.mxu0 0.0
    %281 = vmatpush1.msra.mxu0 0.0
    %282 = vmatprep.subr.mxu0 0.0
    %283 = vmatpush1.msra.mxu0 0.0
    %284 = vmatprep.subr.mxu0 0.0
    %285 = vmatpush1.msra.mxu0 0.0
    %286 = vmatprep.subr.mxu0 0.0
    %287 = vmatpush1.msra.mxu0 0.0
    %288 = vmatprep.subr.mxu0 0.0
    %289 = vmatpush1.msra.mxu0 0.0
    %290 = vmatprep.subr.mxu0 0.0
    %291 = vmatpush1.msra.mxu0 0.0
    %292 = vmatprep.subr.mxu0 0.0
    %293 = vmatpush1.msra.mxu0 0.0
    %294 = vmatprep.subr.mxu0 0.0
    %295 = vmatpush1.msra.mxu0 0.0
    %296 = vmatprep.subr.mxu0 0.0
    %297 = vmatpush1.msra.mxu0 0.0
    %298 = vmatprep.subr.mxu0 0.0
    %299 = vmatpush1.msra.mxu0 0.0
    %300 = vmatprep.subr.mxu0 0.0
    %301 = vmatpush1.msra.mxu0 0.0
    %302 = vmatprep.subr.mxu0 0.0
    %303 = vmatpush1.msra.mxu0 0.0
    %304 = vmatprep.subr.mxu0 0.0
    %305 = vmatpush1.msra.mxu0 0.0
    %306 = vmatprep.subr.mxu0 0.0
    %307 = vmatpush1.msra.mxu0 0.0
    %308 = vmatprep.subr.mxu0 0.0
    %309 = vmatpush1.msra.mxu0 0.0
    %310 = vmatprep.mubr.f32.mxu0 0.0
    %311 = vmatmul.mubr.f32.gmra.mrb[0].mxu0 %v244
    %v312 = vpop.f32.mrb[0].mxu0
    %v313 = vadd.f32 %v27, %v312
    %v314 = vpop.f32.mrb[0].mxu0
    %315 = vdwg.mxu0
    %v316 = vmax.f32 %v313, 0.0
    %v318 = vsel %vm111, %v316, 0
    %320 = vmatprep.subr.mxu0 0.0
    %321 = vmatpush1.msra.mxu0 %v15
    %322 = vmatprep.subr.mxu0 0.0
    %323 = vmatpush1.msra.mxu0 %v16
    %324 = vmatprep.subr.mxu0 0.0
    %325 = vmatpush1.msra.mxu0 %v17
    %326 = vmatprep.subr.mxu0 0.0
    %327 = vmatpush1.msra.mxu0 %v18
    %328 = vmatprep.subr.mxu0 0.0
    %329 = vmatpush1.msra.mxu0 %v19
    %330 = vmatprep.subr.mxu0 0.0
    %331 = vmatpush1.msra.mxu0 %v20
    %332 = vmatprep.subr.mxu0 0.0
    %333 = vmatpush1.msra.mxu0 %v21
    %334 = vmatprep.subr.mxu0 0.0
    %335 = vmatpush1.msra.mxu0 %v22
    %336 = vmatprep.subr.mxu0 0.0
    %337 = vmatpush1.msra.mxu0 0.0
    %338 = vmatprep.subr.mxu0 0.0
    %339 = vmatpush1.msra.mxu0 0.0
    %340 = vmatprep.subr.mxu0 0.0
    %341 = vmatpush1.msra.mxu0 0.0
    %342 = vmatprep.subr.mxu0 0.0
    %343 = vmatpush1.msra.mxu0 0.0
    %344 = vmatprep.subr.mxu0 0.0
    %345 = vmatpush1.msra.mxu0 0.0
    %346 = vmatprep.subr.mxu0 0.0
    %347 = vmatpush1.msra.mxu0 0.0
    %348 = vmatprep.subr.mxu0 0.0
    %349 = vmatpush1.msra.mxu0 0.0
    %350 = vmatprep.subr.mxu0 0.0
    %351 = vmatpush1.msra.mxu0 0.0
    %352 = vmatprep.subr.mxu0 0.0
    %353 = vmatpush1.msra.mxu0 0.0
    %354 = vmatprep.subr.mxu0 0.0
    %355 = vmatpush1.msra.mxu0 0.0
    %356 = vmatprep.subr.mxu0 0.0
    %357 = vmatpush1.msra.mxu0 0.0
    %358 = vmatprep.subr.mxu0 0.0
    %359 = vmatpush1.msra.mxu0 0.0
    %360 = vmatprep.subr.mxu0 0.0
    %361 = vmatpush1.msra.mxu0 0.0
    %362 = vmatprep.subr.mxu0 0.0
    %363 = vmatpush1.msra.mxu0 0.0
    %364 = vmatprep.subr.mxu0 0.0
    %365 = vmatpush1.msra.mxu0 0.0
    %366 = vmatprep.subr.mxu0 0.0
    %367 = vmatpush1.msra.mxu0 0.0
    %368 = vmatprep.subr.mxu0 0.0
    %369 = vmatpush1.msra.mxu0 0.0
    %370 = vmatprep.subr.mxu0 0.0
    %371 = vmatpush1.msra.mxu0 0.0
    %372 = vmatprep.subr.mxu0 0.0
    %373 = vmatpush1.msra.mxu0 0.0
    %374 = vmatprep.subr.mxu0 0.0
    %375 = vmatpush1.msra.mxu0 0.0
    %376 = vmatprep.subr.mxu0 0.0
    %377 = vmatpush1.msra.mxu0 0.0
    %378 = vmatprep.subr.mxu0 0.0
    %379 = vmatpush1.msra.mxu0 0.0
    %380 = vmatprep.subr.mxu0 0.0
    %381 = vmatpush1.msra.mxu0 0.0
    %382 = vmatprep.subr.mxu0 0.0
    %383 = vmatpush1.msra.mxu0 0.0
    %384 = vmatprep.mubr.f32.mxu0 0.0
    %385 = vmatmul.mubr.f32.gmra.mrb[0].mxu0 %v318
    %v386 = vpop.f32.mrb[0].mxu0
    %v387 = vadd.f32 %v110, %v386
    %v388 = vpop.f32.mrb[0].mxu0
    %389 = vdwg.mxu0
    %v390 = vmul.f32 %v387, 0.98
    %v391 = vadd.f32 %v242, %v390
    %v392 = vsub.f32 %v182, %v391
    %v393 = vmul.f32 %v392, %v392
    %395 = vrot.lane.b32.xlu0 %v393, 125
    %v396 = vpop.permute.xlu0 %395
    %vm398 = vcmask 7168
    %v399 = vsel %vm398, %v396, 0.0
    %400 = vadd.xlane.f32.xlu0 %v399
    %v401 = vpop.xlane.xlu0 %400
    %v402 = vrot.slane %v401, 4
    %v403 = vadd.f32 %v401, %v402
    %v404 = vrot.slane %v403, 2
    %v405 = vadd.f32 %v403, %v404
    %v406 = vrot.slane %v405, 1
    %v407 = vadd.f32 %v405, %v406
    %s408 = vtos %v407
    %v409 = vrcp.pop 8.0
    %s410 = vtos %v409
    %s411 = smul.f32 %s408, %s410
    %s412 = scalar_lea.smem [#allocation2], 0
    %413 = sst [smem:[%s412]] %s411
    // Predicated region
    $region10: #{critic_td_forward.1} parent=1 // pred_check
      _
    $region11: #{critic_td_forward.1} parent=1 // pred_check_branch
      %415 = sbr.rel (0) target = $region13
    $region12: #{critic_td_forward.1} parent=1 // pred_region
      %s417 = ssub.s32 16, 16
      %418 = vsyncadd [#allocation3], %s417
      %421 = dma.smem_to_hbm [#allocation2], 16, %s2, [#allocation3]
    $region13: #{critic_td_forward.1} parent=1 // pred_fallthru
      _
    // Predicated region
    $region14: #{critic_td_forward.1} parent=1 // pred_check
      _
    $region15: #{critic_td_forward.1} parent=1 // pred_check_branch
      %423 = sbr.rel (0) target = $region17
    $region16: #{critic_td_forward.1} parent=1 // pred_region
      %424 = dma.done [#allocation3], 16
    $region17: #{critic_td_forward.1} parent=1 // pred_fallthru
      _
    %425 = sfence
    %426 = vsyncpa [#allocation3], 1

</llo_original>
